<compile_context>
chip_gen: v5e
topology: v5e:2x2
jax: 0.10.0
libtpu: 0.0.40
codegen_flags: <defaults>
</compile_context>

<pallas_src>
import functools

import jax
import jax.numpy as jnp
from jax.experimental import pallas as pl
from jax.experimental.pallas import tpu as pltpu

INPUT_DIM = 6
KPAD = 8                 # fc1 contraction dim padded 6 -> 8 for the MXU
H1 = 512
H2 = 128
OUT = 1

MAX_BATCH_TILE = 4096    # rows per grid step (multiple of 8)
SPLIT_THRESHOLD = 1024   # at/above this many rows, use >=2 tiles (v7x 2 TCs)


def _round_up(n, m):
    return ((n + m - 1) // m) * m


def _choose_batch_tile(batch):
    """Adaptive rows-per-tile: no huge padding for small B, >=2 tiles when big."""
    rows = _round_up(max(batch, 1), 8)
    if rows <= MAX_BATCH_TILE:
        if rows >= SPLIT_THRESHOLD:
            # Two tiles so dimension_semantics=("parallel",) gives both v7x
            # TensorCores work; harmless on single-TC v5e/v6e.
            return _round_up((rows + 1) // 2, 8)
        return rows
    return MAX_BATCH_TILE


def _bf16_eup_supported():
    """bf16 VPU/EUP exists on v6e/v7x; v5e and older must run tanh in f32."""
    try:
        kind = jax.devices()[0].device_kind.lower()
    except Exception:
        return False
    return ("v6" in kind) or ("v7" in kind)


def mlp_kernel(x_ref, w1_ref, b1_ref, w2_ref, b2_ref, w3_ref, b3_ref, o_ref,
               *, out_lanes, bf16_eup):
    # ---- fc1: Linear(6->512) on the MXU (K padded to 8), f32 accumulation.
    x = x_ref[...].astype(jnp.bfloat16)                       # (TB, 8)
    z1 = jnp.dot(x, w1_ref[...],
                 preferred_element_type=jnp.float32) + b1_ref[...]   # (TB, 512) f32

    # Tanh (Dropout(0.25) -> identity at inference).  bf16 EUP where available.
    if bf16_eup:
        h1 = jnp.tanh(z1.astype(jnp.bfloat16))                # bf16, feeds MXU directly
    else:
        h1 = jnp.tanh(z1).astype(jnp.bfloat16)                # f32 EUP (v5e), cast for MXU

    # ---- fc2: Linear(512->128) on the MXU, bf16 operands, f32 accumulation.
    z2 = jnp.dot(h1, w2_ref[...],
                 preferred_element_type=jnp.float32) + b2_ref[...]   # (TB, 128) f32
    if bf16_eup:
        h2 = jnp.tanh(z2.astype(jnp.bfloat16)).astype(jnp.float32)
    else:
        h2 = jnp.tanh(z2)                                     # (TB, 128) f32

    # ---- fc_final: Linear(128->1) as VPU multiply + lane reduce; lane-dense
    # (8, out_lanes) store instead of a lane-sparse (TB, 1) column.
    h2_r = h2.reshape(8, out_lanes, H2)                       # leading-dim split
    out = jnp.sum(h2_r * w3_ref[...], axis=-1)                # (8, out_lanes)
    o_ref[...] = out + b3_ref[...]


def example_nn_forward(x, params):
    """x: (B, INPUT_DIM) float32 -> (B, 1) float32 (ExampleNN eval-mode forward)."""
    w1, b1, w2, b2, w3, b3 = params
    B = x.shape[0]

    tb = _choose_batch_tile(B)
    num_tiles = (B + tb - 1) // tb
    b_pad = num_tiles * tb
    out_lanes = tb // 8

    # One-time layout / dtype prep for the kernel.
    x_p = jnp.pad(x, ((0, b_pad - B), (0, KPAD - INPUT_DIM)))          # rows + K pad
    w1_p = jnp.pad(w1, ((0, KPAD - INPUT_DIM), (0, 0))).astype(jnp.bfloat16)
    b1_2d = b1.reshape(1, H1)
    w2_bf16 = w2.astype(jnp.bfloat16)
    b2_2d = b2.reshape(1, H2)
    w3_row = w3.reshape(1, H2)
    b3_2d = b3.reshape(1, 1)

    bf16_eup = _bf16_eup_supported()

    weight_bytes = (w1_p.size * 2 + b1_2d.size * 4 + w2_bf16.size * 2 +
                    b2_2d.size * 4 + w3_row.size * 4 + 4)
    cost = pl.CostEstimate(
        flops=2 * b_pad * (KPAD * H1 + H1 * H2 + H2),
        transcendentals=b_pad * (H1 + H2),
        bytes_accessed=b_pad * (KPAD * 4 + 4) + weight_bytes,
    )

    out_slab = pl.pallas_call(
        functools.partial(mlp_kernel, out_lanes=out_lanes, bf16_eup=bf16_eup),
        out_shape=jax.ShapeDtypeStruct((num_tiles * 8, out_lanes), jnp.float32),
        grid=(num_tiles,),
        in_specs=[
            pl.BlockSpec((tb, KPAD), lambda i: (i, 0)),    # x: batch-tiled, pipelined
            pl.BlockSpec((KPAD, H1), lambda i: (0, 0)),    # w1 (bf16): VMEM-resident
            pl.BlockSpec((1, H1), lambda i: (0, 0)),       # b1
            pl.BlockSpec((H1, H2), lambda i: (0, 0)),      # w2 (bf16): VMEM-resident
            pl.BlockSpec((1, H2), lambda i: (0, 0)),       # b2
            pl.BlockSpec((1, H2), lambda i: (0, 0)),       # w3 as broadcast row
            pl.BlockSpec((1, 1), lambda i: (0, 0)),        # b3
        ],
        out_specs=pl.BlockSpec((8, out_lanes), lambda i: (i, 0)),
        compiler_params=pltpu.CompilerParams(
            dimension_semantics=("parallel",),   # shard batch tiles over v7x's 2 TCs
            vmem_limit_bytes=32 * 1024 * 1024,   # safe on v7x (64 MiB physical)
        ),
        cost_estimate=cost,
    )(x_p, w1_p, b1_2d, w2_bf16, b2_2d, w3_row, b3_2d)

    # Lane-dense slab -> (B, 1): row t*tb + i*out_lanes + j of the padded batch
    # lives at slab[(t*8 + i), j]; row-major reshape recovers batch order.
    return out_slab.reshape(b_pad, 1)[:B]


def init_params(key):
    """Deterministic init mimicking PyTorch nn.Linear defaults:
    U(-1/sqrt(fan_in), 1/sqrt(fan_in)) for both weight and bias."""
    def linear(k, fan_in, fan_out):
        kw, kb = jax.random.split(k)
        bound = 1.0 / jnp.sqrt(jnp.float32(fan_in))
        w = jax.random.uniform(kw, (fan_in, fan_out), jnp.float32, -bound, bound)
        b = jax.random.uniform(kb, (1, fan_out), jnp.float32, -bound, bound)
        return w, b

    k1, k2, k3 = jax.random.split(key, 3)
    w1, b1 = linear(k1, INPUT_DIM, H1)
    w2, b2 = linear(k2, H1, H2)
    w3, b3 = linear(k3, H2, OUT)
    return (w1, b1, w2, b2, w3, b3)


if __name__ == "__main__":
    key = jax.random.PRNGKey(0)
    k_params, k_x = jax.random.split(key)
    params = init_params(k_params)

    batch = 8
    x = jax.random.normal(k_x, (batch, INPUT_DIM), dtype=jnp.float32)

    y = jax.block_until_ready(example_nn_forward(x, params))
    assert y.shape == (batch, OUT)

    # Pure-f32 reference; tolerance covers the bf16 MXU operands / bf16 tanh path.
    w1, b1, w2, b2, w3, b3 = params
    h1 = jnp.tanh(x @ w1 + b1)
    h2 = jnp.tanh(h1 @ w2 + b2)
    ref = h2 @ w3 + b3
    assert jnp.allclose(y, ref, atol=5e-2, rtol=5e-2), float(jnp.max(jnp.abs(y - ref)))

    print("KERNEL_OK")
</pallas_src>

<mosaic_0001>
module attributes {stable_mosaic.version = 11 : i64} {
  func.func @mlp_kernel(%arg0: i32, %arg1: memref<8x8xf32, #tpu.memory_space<vmem>>, %arg2: memref<8x512xbf16, #tpu.memory_space<vmem>>, %arg3: memref<1x512xf32, #tpu.memory_space<vmem>>, %arg4: memref<512x128xbf16, #tpu.memory_space<vmem>>, %arg5: memref<1x128xf32, #tpu.memory_space<vmem>>, %arg6: memref<1x128xf32, #tpu.memory_space<vmem>>, %arg7: memref<1x1xf32, #tpu.memory_space<vmem>>, %arg8: memref<8x1xf32, #tpu.memory_space<vmem>>) attributes {dimension_semantics = [#tpu.dimension_semantics<parallel>], iteration_bounds = array<i64: 1>, scalar_prefetch = 0 : i64, scratch_operands = 0 : i64, tpu.core_type = #tpu.core_type<tc>, window_params = [{transform_indices = @transform_0, window_bounds = array<i64: 8, 8>}, {pipeline_mode = #tpu.pipeline_mode<synchronous>, transform_indices = @transform_1, window_bounds = array<i64: 8, 512>}, {pipeline_mode = #tpu.pipeline_mode<synchronous>, transform_indices = @transform_2, window_bounds = array<i64: 1, 512>}, {pipeline_mode = #tpu.pipeline_mode<synchronous>, transform_indices = @transform_3, window_bounds = array<i64: 512, 128>}, {pipeline_mode = #tpu.pipeline_mode<synchronous>, transform_indices = @transform_4, window_bounds = array<i64: 1, 128>}, {pipeline_mode = #tpu.pipeline_mode<synchronous>, transform_indices = @transform_5, window_bounds = array<i64: 1, 128>}, {pipeline_mode = #tpu.pipeline_mode<synchronous>, transform_indices = @transform_6, window_bounds = array<i64: 1, 1>}, {transform_indices = @transform_7, window_bounds = array<i64: 8, 1>}]} {
    %c0 = arith.constant 0 : index
    %c0_0 = arith.constant 0 : index
    %0 = vector.load %arg1[%c0, %c0_0] : memref<8x8xf32, #tpu.memory_space<vmem>>, vector<8x8xf32>
    %1 = arith.truncf %0 : vector<8x8xf32> to vector<8x8xbf16>
    %c0_1 = arith.constant 0 : index
    %c0_2 = arith.constant 0 : index
    %2 = vector.load %arg2[%c0_1, %c0_2] : memref<8x512xbf16, #tpu.memory_space<vmem>>, vector<8x512xbf16>
    %cst = arith.constant dense<0.000000e+00> : vector<8x512xf32>
    %3 = tpu.matmul %1, %2, %cst {dimension_numbers = #tpu.dot_dimension_numbers<[1], [0], [0], [1], [0, 0, 1, 1], [], []>} : vector<8x8xbf16>, vector<8x512xbf16>, vector<8x512xf32> -> vector<8x512xf32>
    %c0_3 = arith.constant 0 : index
    %c0_4 = arith.constant 0 : index
    %4 = vector.load %arg3[%c0_3, %c0_4] : memref<1x512xf32, #tpu.memory_space<vmem>>, vector<1x512xf32>
    %5 = vector.broadcast %4 : vector<1x512xf32> to vector<8x512xf32>
    %6 = arith.addf %3, %5 : vector<8x512xf32>
    %7 = math.tanh %6 : vector<8x512xf32>
    %8 = arith.truncf %7 : vector<8x512xf32> to vector<8x512xbf16>
    %c0_5 = arith.constant 0 : index
    %c0_6 = arith.constant 0 : index
    %9 = vector.load %arg4[%c0_5, %c0_6] : memref<512x128xbf16, #tpu.memory_space<vmem>>, vector<512x128xbf16>
    %cst_7 = arith.constant dense<0.000000e+00> : vector<8x128xf32>
    %10 = tpu.matmul %8, %9, %cst_7 {dimension_numbers = #tpu.dot_dimension_numbers<[1], [0], [0], [1], [0, 0, 1, 1], [], []>} : vector<8x512xbf16>, vector<512x128xbf16>, vector<8x128xf32> -> vector<8x128xf32>
    %c0_8 = arith.constant 0 : index
    %c0_9 = arith.constant 0 : index
    %11 = vector.load %arg5[%c0_8, %c0_9] : memref<1x128xf32, #tpu.memory_space<vmem>>, vector<1x128xf32>
    %12 = vector.broadcast %11 : vector<1x128xf32> to vector<8x128xf32>
    %13 = arith.addf %10, %12 : vector<8x128xf32>
    %14 = math.tanh %13 : vector<8x128xf32>
    %15 = vector.shape_cast %14 : vector<8x128xf32> to vector<8x1x128xf32>
    %c0_10 = arith.constant 0 : index
    %c0_11 = arith.constant 0 : index
    %16 = vector.load %arg6[%c0_10, %c0_11] : memref<1x128xf32, #tpu.memory_space<vmem>>, vector<1x128xf32>
    %17 = vector.shape_cast %16 : vector<1x128xf32> to vector<1x1x128xf32>
    %18 = vector.broadcast %17 : vector<1x1x128xf32> to vector<8x1x128xf32>
    %19 = arith.mulf %15, %18 : vector<8x1x128xf32>
    %cst_12 = arith.constant dense<0.000000e+00> : vector<8x1xf32>
    %20 = vector.multi_reduction <add>, %19, %cst_12 [2] : vector<8x1x128xf32> to vector<8x1xf32>
    %c0_13 = arith.constant 0 : index
    %c0_14 = arith.constant 0 : index
    %21 = vector.load %arg7[%c0_13, %c0_14] : memref<1x1xf32, #tpu.memory_space<vmem>>, vector<1x1xf32>
    %22 = vector.broadcast %21 : vector<1x1xf32> to vector<8x1xf32>
    %23 = arith.addf %20, %22 : vector<8x1xf32>
    %c0_15 = arith.constant 0 : index
    %c0_16 = arith.constant 0 : index
    %24 = vector.load %arg8[%c0_15, %c0_16] : memref<8x1xf32, #tpu.memory_space<vmem>>, vector<8x1xf32>
    tpu.vector_store %arg8[%c0_15, %c0_16], %23 {strides = array<i32>} : memref<8x1xf32, #tpu.memory_space<vmem>>, vector<8x1xf32>,
    return
  }
  func.func @transform_0(%arg0: i32) -> (i32, i32) {
    %c0_i32 = arith.constant 0 : i32
    %c0_i32_0 = arith.constant 0 : i32
    return %arg0, %c0_i32 : i32, i32
  }
  func.func @transform_1(%arg0: i32) -> (i32, i32) {
    %c0_i32 = arith.constant 0 : i32
    %c0_i32_0 = arith.constant 0 : i32
    %c0_i32_1 = arith.constant 0 : i32
    return %c0_i32, %c0_i32_0 : i32, i32
  }
  func.func @transform_2(%arg0: i32) -> (i32, i32) {
    %c0_i32 = arith.constant 0 : i32
    %c0_i32_0 = arith.constant 0 : i32
    %c0_i32_1 = arith.constant 0 : i32
    return %c0_i32, %c0_i32_0 : i32, i32
  }
  func.func @transform_3(%arg0: i32) -> (i32, i32) {
    %c0_i32 = arith.constant 0 : i32
    %c0_i32_0 = arith.constant 0 : i32
    %c0_i32_1 = arith.constant 0 : i32
    return %c0_i32, %c0_i32_0 : i32, i32
  }
  func.func @transform_4(%arg0: i32) -> (i32, i32) {
    %c0_i32 = arith.constant 0 : i32
    %c0_i32_0 = arith.constant 0 : i32
    %c0_i32_1 = arith.constant 0 : i32
    return %c0_i32, %c0_i32_0 : i32, i32
  }
  func.func @transform_5(%arg0: i32) -> (i32, i32) {
    %c0_i32 = arith.constant 0 : i32
    %c0_i32_0 = arith.constant 0 : i32
    %c0_i32_1 = arith.constant 0 : i32
    return %c0_i32, %c0_i32_0 : i32, i32
  }
  func.func @transform_6(%arg0: i32) -> (i32, i32) {
    %c0_i32 = arith.constant 0 : i32
    %c0_i32_0 = arith.constant 0 : i32
    %c0_i32_1 = arith.constant 0 : i32
    return %c0_i32, %c0_i32_0 : i32, i32
  }
  func.func @transform_7(%arg0: i32) -> (i32, i32) {
    %c0_i32 = arith.constant 0 : i32
    %c0_i32_0 = arith.constant 0 : i32
    return %arg0, %c0_i32 : i32, i32
  }
}

</mosaic_0001>

<llo_original>
// kernel: tpu_custom_call.1
$region0: #{tpu_custom_call.1}
  #allocation0 [shape = 'u32[]', space=smem, size = 0x4, offset = 0x4, fixed_abs, tag = 'smem constant byte address 0x4 - core index']
  #allocation1 [shape = 'u32[72,128]{1,0:T(1,128)}', space=vmem, size = 0x9000, scoped, tag = 'internal scratch']
  #allocation2 [shape = 'f32[1,1]{1,0:T(1,128)S(1)}', space=vmem, size = 0x200, scoped, tag = 'scoped memory for tpu_custom_call.1']
  %s0 = inlined_call_operand.hbm [shape: f32[8,8], index: 0, kind: input, shape index: {}]
  %s1 = inlined_call_operand.hbm [shape: bf16[8,512], index: 1, kind: input, shape index: {}]
  %s2 = inlined_call_operand.hbm [shape: f32[1,512], index: 2, kind: input, shape index: {}]
  %s3 = inlined_call_operand.hbm [shape: bf16[512,128], index: 3, kind: input, shape index: {}]
  %s4 = inlined_call_operand.vmem [shape: f32[1,128], index: 4, kind: input, shape index: {}]
  %s5 = inlined_call_operand.vmem [shape: f32[1,128], index: 5, kind: input, shape index: {}]
  %s6 = inlined_call_operand.<no memory space> [shape: f32[1,1], index: 6, kind: input, shape index: {}]
  %s7 = inlined_call_operand.vmem [shape: f32[8,1], index: 7, kind: output, shape index: {}]
  %s8 = sld [smem:[#allocation0]]
  $region54: #{tpu_custom_call.1} parent=0
    _
  %s10 = ssub.s32 1, %s8
  %s11 = scalar_select 0, %s10, %s8
  %v12 = vstv %s6
  %13 = vst [vmem:[#allocation2] sm:$0x1] %v12
  $region1: #{tpu_custom_call.1} parent=0
    #allocation3 [shape = 'u8[4096]{0}', space=vmem, size = 0x1000, scoped, tag = 'input window, operand 0, single buffered']
    #allocation4 [shape = 's32[1]{0}', space=sflag, size = 0x4, scoped, tag = 'scoped memory for tpu_custom_call.1']
    #allocation5 [shape = 'u8[8192]{0}', space=vmem, size = 0x2000, scoped, tag = 'input window, operand 1, single buffered']
    #allocation6 [shape = 's32[1]{0}', space=sflag, size = 0x4, scoped, tag = 'scoped memory for tpu_custom_call.1']
    #allocation7 [shape = 'u8[2048]{0}', space=vmem, size = 0x800, scoped, tag = 'input window, operand 2, single buffered']
    #allocation8 [shape = 'u8[131072]{0}', space=vmem, size = 0x20000, scoped, tag = 'input window, operand 3, single buffered']
    #allocation9 [shape = 's32[1]{0}', space=sflag, size = 0x4, scoped, tag = 'scoped memory for tpu_custom_call.1']
    %14 = vsyncpa [#allocation4], 0
    %15 = vsyncpa [#allocation6], 0
    %16 = vsyncpa [#allocation9], 0
    // Predicated region
    $region2: #{tpu_custom_call.1} parent=1 // pred_check
      _
    $region3: #{tpu_custom_call.1} parent=1 // pred_check_branch
      %18 = sbr.rel (0) target = $region5
    $region4: #{tpu_custom_call.1} parent=1 // pred_region
      %20 = vsyncadd [#allocation4], 0
      %s22 = sshll.u32 %s0, 4
      %s23 = int_to_ptr.hbm [resolvable:$true] %s22
      %s24 = sshll.u32 [#allocation3], 4
      %s25 = int_to_ptr.vmem [resolvable:$true] %s24
      %27 = dma.hbm_to_vmem [thread:$0]  %s23, 128, %s25, [#allocation4]
    $region5: #{tpu_custom_call.1} parent=1 // pred_fallthru
      _
    // Predicated region
    $region6: #{tpu_custom_call.1} parent=1 // pred_check
      _
    $region7: #{tpu_custom_call.1} parent=1 // pred_check_branch
      %29 = sbr.rel (0) target = $region9
    $region8: #{tpu_custom_call.1} parent=1 // pred_region
      %31 = vsyncadd [#allocation6], 0
      %s33 = sshll.u32 %s1, 4
      %s34 = int_to_ptr.hbm [resolvable:$true] %s33
      %s35 = sshll.u32 [#allocation5], 4
      %s36 = int_to_ptr.vmem [resolvable:$true] %s35
      %38 = dma.hbm_to_vmem [thread:$0]  %s34, 256, %s36, [#allocation6]
    $region9: #{tpu_custom_call.1} parent=1 // pred_fallthru
      _
    // Predicated region
    $region10: #{tpu_custom_call.1} parent=1 // pred_check
      _
    $region11: #{tpu_custom_call.1} parent=1 // pred_check_branch
      %40 = sbr.rel (0) target = $region13
    $region12: #{tpu_custom_call.1} parent=1 // pred_region
      %42 = vsyncadd [#allocation6], 0
      %s44 = sshll.u32 %s2, 4
      %s45 = int_to_ptr.hbm [resolvable:$true] %s44
      %s46 = sshll.u32 [#allocation7], 4
      %s47 = int_to_ptr.vmem [resolvable:$true] %s46
      %49 = dma.hbm_to_vmem [thread:$0]  %s45, 64, %s47, [#allocation6]
    $region13: #{tpu_custom_call.1} parent=1 // pred_fallthru
      _
    // Predicated region
    $region14: #{tpu_custom_call.1} parent=1 // pred_check
      _
    $region15: #{tpu_custom_call.1} parent=1 // pred_check_branch
      %51 = sbr.rel (0) target = $region17
    $region16: #{tpu_custom_call.1} parent=1 // pred_region
      %53 = vsyncadd [#allocation9], 0
      %s54 = sshll.u32 %s3, 4
      %s55 = int_to_ptr.hbm [resolvable:$true] %s54
      %s56 = sshll.u32 [#allocation8], 4
      %s57 = int_to_ptr.vmem [resolvable:$true] %s56
      %62 = dma.hbm_to_vmem [thread:$0]  %s55, 4096, %s57, [#allocation9], 64, 64, 4
    $region17: #{tpu_custom_call.1} parent=1 // pred_fallthru
      _
    // Predicated region
    $region18: #{tpu_custom_call.1} parent=1 // pred_check
      _
    $region19: #{tpu_custom_call.1} parent=1 // pred_check_branch
      %64 = sbr.rel (0) target = $region21
    $region20: #{tpu_custom_call.1} parent=1 // pred_region
      _
    $region21: #{tpu_custom_call.1} parent=1 // pred_fallthru
      _
    // Predicated region
    $region22: #{tpu_custom_call.1} parent=1 // pred_check
      _
    $region23: #{tpu_custom_call.1} parent=1 // pred_check_branch
      %66 = sbr.rel (0) target = $region25
    $region24: #{tpu_custom_call.1} parent=1 // pred_region
      _
    $region25: #{tpu_custom_call.1} parent=1 // pred_fallthru
      _
    // Predicated region
    $region26: #{tpu_custom_call.1} parent=1 // pred_check
      _
    $region27: #{tpu_custom_call.1} parent=1 // pred_check_branch
      %68 = sbr.rel (0) target = $region29
    $region28: #{tpu_custom_call.1} parent=1 // pred_region
      _
    $region29: #{tpu_custom_call.1} parent=1 // pred_fallthru
      _
    // Predicated region
    $region30: #{tpu_custom_call.1} parent=1 // pred_check
      _
    $region31: #{tpu_custom_call.1} parent=1 // pred_check_branch
      %70 = sbr.rel (0) target = $region33
    $region32: #{tpu_custom_call.1} parent=1 // pred_region
      %72 = dma.done [#allocation4], 128
    $region33: #{tpu_custom_call.1} parent=1 // pred_fallthru
      _
    // Predicated region
    $region34: #{tpu_custom_call.1} parent=1 // pred_check
      _
    $region35: #{tpu_custom_call.1} parent=1 // pred_check_branch
      %74 = sbr.rel (0) target = $region37
    $region36: #{tpu_custom_call.1} parent=1 // pred_region
      %76 = dma.done [#allocation6], 256
    $region37: #{tpu_custom_call.1} parent=1 // pred_fallthru
      _
    // Predicated region
    $region38: #{tpu_custom_call.1} parent=1 // pred_check
      _
    $region39: #{tpu_custom_call.1} parent=1 // pred_check_branch
      %78 = sbr.rel (0) target = $region41
    $region40: #{tpu_custom_call.1} parent=1 // pred_region
      %80 = dma.done [#allocation6], 64
    $region41: #{tpu_custom_call.1} parent=1 // pred_fallthru
      _
    // Predicated region
    $region42: #{tpu_custom_call.1} parent=1 // pred_check
      _
    $region43: #{tpu_custom_call.1} parent=1 // pred_check_branch
      %82 = sbr.rel (0) target = $region45
    $region44: #{tpu_custom_call.1} parent=1 // pred_region
      %84 = dma.done [#allocation9], 4096
    $region45: #{tpu_custom_call.1} parent=1 // pred_fallthru
      _
    %v86 = vld [vmem:[#allocation3] sm:$0xff]
    %v87 = vpack.c.bf16 %v86, %v86
    %v88 = vld [vmem:[#allocation5] sm:$0xff]
    %v89 = vld [vmem:[#allocation5 + $0x8] sm:$0xff]
    %v90 = vld [vmem:[#allocation7] sm:$0xf]
    %v92 = vperm.slane %v90, 0
    %v93 = vperm.slane %v90, 1
    %v94 = vperm.slane %v90, 2
    %v95 = vperm.slane %v90, 3
    %v102 = vunpack.c.l.b16 %v88
    %v103 = vunpack.c.h.b16 %v88
    %v104 = vunpack.c.l.b16 %v89
    %v105 = vunpack.c.h.b16 %v89
    %v106 = vpack.c.b16 %v102, %v102
    %v107 = vpack.c.b16 %v103, %v103
    %v108 = vpack.c.b16 %v104, %v104
    %v109 = vpack.c.b16 %v105, %v105
    %vm110 = vcmask 64512
    %v112 = vsel %vm110, %v87, 0
    %vm114 = vcmask 1043456
    %v116 = vsel %vm114, %v106, 0
    %v119 = vsel %vm114, %v107, 0
    %v122 = vsel %vm114, %v108, 0
    %v125 = vsel %vm114, %v109, 0
    %127 = vmatpush.bf16.msra.mxu0 0
    %128 = vmatpush.bf16.msra.mxu0 0
    %129 = vmatpush.bf16.msra.mxu0 0
    %130 = vmatpush.bf16.msra.mxu0 0
    %131 = vmatpush.bf16.msra.mxu0 0
    %132 = vmatpush.bf16.msra.mxu0 0
    %133 = vmatpush.bf16.msra.mxu0 0
    %134 = vmatpush.bf16.msra.mxu0 %v116
    %135 = vmatmul.bf16.gmra.mxu0 %v112
    %v136 = vpop.f32.mrf.mxu0
    %v137 = vadd.f32 %v92, %v136
    %v138 = vpop.f32.mrf.mxu0
    %139 = vdwg.mxu0
    %140 = vmatpush.bf16.msra.mxu0 0
    %141 = vmatpush.bf16.msra.mxu0 0
    %142 = vmatpush.bf16.msra.mxu0 0
    %143 = vmatpush.bf16.msra.mxu0 0
    %144 = vmatpush.bf16.msra.mxu0 0
    %145 = vmatpush.bf16.msra.mxu0 0
    %146 = vmatpush.bf16.msra.mxu0 0
    %147 = vmatpush.bf16.msra.mxu0 %v119
    %148 = vmatmul.bf16.gmra.mxu0 %v112
    %v149 = vpop.f32.mrf.mxu0
    %v150 = vadd.f32 %v93, %v149
    %v151 = vpop.f32.mrf.mxu0
    %152 = vdwg.mxu0
    %153 = vmatpush.bf16.msra.mxu0 0
    %154 = vmatpush.bf16.msra.mxu0 0
    %155 = vmatpush.bf16.msra.mxu0 0
    %156 = vmatpush.bf16.msra.mxu0 0
    %157 = vmatpush.bf16.msra.mxu0 0
    %158 = vmatpush.bf16.msra.mxu0 0
    %159 = vmatpush.bf16.msra.mxu0 0
    %160 = vmatpush.bf16.msra.mxu0 %v122
    %161 = vmatmul.bf16.gmra.mxu0 %v112
    %v162 = vpop.f32.mrf.mxu0
    %v163 = vadd.f32 %v94, %v162
    %v164 = vpop.f32.mrf.mxu0
    %165 = vdwg.mxu0
    %166 = vmatpush.bf16.msra.mxu0 0
    %167 = vmatpush.bf16.msra.mxu0 0
    %168 = vmatpush.bf16.msra.mxu0 0
    %169 = vmatpush.bf16.msra.mxu0 0
    %170 = vmatpush.bf16.msra.mxu0 0
    %171 = vmatpush.bf16.msra.mxu0 0
    %172 = vmatpush.bf16.msra.mxu0 0
    %173 = vmatpush.bf16.msra.mxu0 %v125
    %174 = vmatmul.bf16.gmra.mxu0 %v112
    %v175 = vpop.f32.mrf.mxu0
    %v176 = vadd.f32 %v95, %v175
    %v177 = vpop.f32.mrf.mxu0
    %178 = vdwg.mxu0
    %v179 = vtanh.pop %v137
    %v180 = vtanh.pop %v150
    %v181 = vtanh.pop %v163
    %v182 = vtanh.pop %v176
    %v183 = vpack.c.bf16 %v179, %v179
    %v184 = vpack.c.bf16 %v180, %v180
    %v185 = vpack.c.bf16 %v181, %v181
    %v186 = vpack.c.bf16 %v182, %v182
    %v187 = vld [vmem:[#allocation8] sm:$0xf]
    %v188 = vld [vmem:[#allocation8 + $0x4] sm:$0xf]
    %v189 = vld [vmem:[#allocation8 + $0x8] sm:$0xf]
    %v190 = vld [vmem:[#allocation8 + $0xc] sm:$0xf]
    %v191 = vld [vmem:[#allocation8 + $0x10] sm:$0xf]
    %v192 = vld [vmem:[#allocation8 + $0x14] sm:$0xf]
    %v193 = vld [vmem:[#allocation8 + $0x18] sm:$0xf]
    %v194 = vld [vmem:[#allocation8 + $0x1c] sm:$0xf]
    %v195 = vld [vmem:[#allocation8 + $0x20] sm:$0xf]
    %v196 = vld [vmem:[#allocation8 + $0x24] sm:$0xf]
    %v197 = vld [vmem:[#allocation8 + $0x28] sm:$0xf]
    %v198 = vld [vmem:[#allocation8 + $0x2c] sm:$0xf]
    %v199 = vld [vmem:[#allocation8 + $0x30] sm:$0xf]
    %v200 = vld [vmem:[#allocation8 + $0x34] sm:$0xf]
    %v201 = vld [vmem:[#allocation8 + $0x38] sm:$0xf]
    %v202 = vld [vmem:[#allocation8 + $0x3c] sm:$0xf]
    %v203 = vld [vmem:[#allocation8 + $0x40] sm:$0xf]
    %v204 = vld [vmem:[#allocation8 + $0x44] sm:$0xf]
    %v205 = vld [vmem:[#allocation8 + $0x48] sm:$0xf]
    %v206 = vld [vmem:[#allocation8 + $0x4c] sm:$0xf]
    %v207 = vld [vmem:[#allocation8 + $0x50] sm:$0xf]
    %v208 = vld [vmem:[#allocation8 + $0x54] sm:$0xf]
    %v209 = vld [vmem:[#allocation8 + $0x58] sm:$0xf]
    %v210 = vld [vmem:[#allocation8 + $0x5c] sm:$0xf]
    %v211 = vld [vmem:[#allocation8 + $0x60] sm:$0xf]
    %v212 = vld [vmem:[#allocation8 + $0x64] sm:$0xf]
    %v213 = vld [vmem:[#allocation8 + $0x68] sm:$0xf]
    %v214 = vld [vmem:[#allocation8 + $0x6c] sm:$0xf]
    %v215 = vld [vmem:[#allocation8 + $0x70] sm:$0xf]
    %v216 = vld [vmem:[#allocation8 + $0x74] sm:$0xf]
    %v217 = vld [vmem:[#allocation8 + $0x78] sm:$0xf]
    %v218 = vld [vmem:[#allocation8 + $0x7c] sm:$0xf]
    %v219 = vld [vmem:[#allocation8 + $0x80] sm:$0xf]
    %v220 = vld [vmem:[#allocation8 + $0x84] sm:$0xf]
    %v221 = vld [vmem:[#allocation8 + $0x88] sm:$0xf]
    %v222 = vld [vmem:[#allocation8 + $0x8c] sm:$0xf]
    %v223 = vld [vmem:[#allocation8 + $0x90] sm:$0xf]
    %v224 = vld [vmem:[#allocation8 + $0x94] sm:$0xf]
    %v225 = vld [vmem:[#allocation8 + $0x98] sm:$0xf]
    %v226 = vld [vmem:[#allocation8 + $0x9c] sm:$0xf]
    %v227 = vld [vmem:[#allocation8 + $0xa0] sm:$0xf]
    %v228 = vld [vmem:[#allocation8 + $0xa4] sm:$0xf]
    %v229 = vld [vmem:[#allocation8 + $0xa8] sm:$0xf]
    %v230 = vld [vmem:[#allocation8 + $0xac] sm:$0xf]
    %v231 = vld [vmem:[#allocation8 + $0xb0] sm:$0xf]
    %v232 = vld [vmem:[#allocation8 + $0xb4] sm:$0xf]
    %v233 = vld [vmem:[#allocation8 + $0xb8] sm:$0xf]
    %v234 = vld [vmem:[#allocation8 + $0xbc] sm:$0xf]
    %v235 = vld [vmem:[#allocation8 + $0xc0] sm:$0xf]
    %v236 = vld [vmem:[#allocation8 + $0xc4] sm:$0xf]
    %v237 = vld [vmem:[#allocation8 + $0xc8] sm:$0xf]
    %v238 = vld [vmem:[#allocation8 + $0xcc] sm:$0xf]
    %v239 = vld [vmem:[#allocation8 + $0xd0] sm:$0xf]
    %v240 = vld [vmem:[#allocation8 + $0xd4] sm:$0xf]
    %v241 = vld [vmem:[#allocation8 + $0xd8] sm:$0xf]
    %v242 = vld [vmem:[#allocation8 + $0xdc] sm:$0xf]
    %v243 = vld [vmem:[#allocation8 + $0xe0] sm:$0xf]
    %v244 = vld [vmem:[#allocation8 + $0xe4] sm:$0xf]
    %v245 = vld [vmem:[#allocation8 + $0xe8] sm:$0xf]
    %v246 = vld [vmem:[#allocation8 + $0xec] sm:$0xf]
    %v247 = vld [vmem:[#allocation8 + $0xf0] sm:$0xf]
    %v248 = vld [vmem:[#allocation8 + $0xf4] sm:$0xf]
    %v249 = vld [vmem:[#allocation8 + $0xf8] sm:$0xf]
    %v250 = vld [vmem:[#allocation8 + $0xfc] sm:$0xf]
    %v251 = vld [vmem:[%s4] sm:$0x1]
    %v253 = vperm.slane %v251, 0
    %v319 = vunpack.c.l.b16 %v187
    %v320 = vunpack.c.l.b16 %v188
    %v321 = vunpack.c.l.b16 %v189
    %v322 = vunpack.c.l.b16 %v190
    %v323 = vunpack.c.l.b16 %v191
    %v324 = vunpack.c.l.b16 %v192
    %v325 = vunpack.c.l.b16 %v193
    %v326 = vunpack.c.l.b16 %v194
    %v327 = vunpack.c.l.b16 %v195
    %v328 = vunpack.c.l.b16 %v196
    %v329 = vunpack.c.l.b16 %v197
    %v330 = vunpack.c.l.b16 %v198
    %v331 = vunpack.c.l.b16 %v199
    %v332 = vunpack.c.l.b16 %v200
    %v333 = vunpack.c.l.b16 %v201
    %v334 = vunpack.c.l.b16 %v202
    %v335 = vunpack.c.l.b16 %v203
    %v336 = vunpack.c.l.b16 %v204
    %v337 = vunpack.c.l.b16 %v205
    %v338 = vunpack.c.l.b16 %v206
    %v339 = vunpack.c.l.b16 %v207
    %v340 = vunpack.c.l.b16 %v208
    %v341 = vunpack.c.l.b16 %v209
    %v342 = vunpack.c.l.b16 %v210
    %v343 = vunpack.c.l.b16 %v211
    %v344 = vunpack.c.l.b16 %v212
    %v345 = vunpack.c.l.b16 %v213
    %v346 = vunpack.c.l.b16 %v214
    %v347 = vunpack.c.l.b16 %v215
    %v348 = vunpack.c.l.b16 %v216
    %v349 = vunpack.c.l.b16 %v217
    %v350 = vunpack.c.l.b16 %v218
    %v351 = vunpack.c.l.b16 %v219
    %v352 = vunpack.c.l.b16 %v220
    %v353 = vunpack.c.l.b16 %v221
    %v354 = vunpack.c.l.b16 %v222
    %v355 = vunpack.c.l.b16 %v223
    %v356 = vunpack.c.l.b16 %v224
    %v357 = vunpack.c.l.b16 %v225
    %v358 = vunpack.c.l.b16 %v226
    %v359 = vunpack.c.l.b16 %v227
    %v360 = vunpack.c.l.b16 %v228
    %v361 = vunpack.c.l.b16 %v229
    %v362 = vunpack.c.l.b16 %v230
    %v363 = vunpack.c.l.b16 %v231
    %v364 = vunpack.c.l.b16 %v232
    %v365 = vunpack.c.l.b16 %v233
    %v366 = vunpack.c.l.b16 %v234
    %v367 = vunpack.c.l.b16 %v235
    %v368 = vunpack.c.l.b16 %v236
    %v369 = vunpack.c.l.b16 %v237
    %v370 = vunpack.c.l.b16 %v238
    %v371 = vunpack.c.l.b16 %v239
    %v372 = vunpack.c.l.b16 %v240
    %v373 = vunpack.c.l.b16 %v241
    %v374 = vunpack.c.l.b16 %v242
    %v375 = vunpack.c.l.b16 %v243
    %v376 = vunpack.c.l.b16 %v244
    %v377 = vunpack.c.l.b16 %v245
    %v378 = vunpack.c.l.b16 %v246
    %v379 = vunpack.c.l.b16 %v247
    %v380 = vunpack.c.l.b16 %v248
    %v381 = vunpack.c.l.b16 %v249
    %v382 = vunpack.c.l.b16 %v250
    %v383 = vpack.c.b16 %v320, %v319
    %v384 = vpack.c.b16 %v322, %v321
    %v385 = vpack.c.b16 %v324, %v323
    %v386 = vpack.c.b16 %v326, %v325
    %v387 = vpack.c.b16 %v328, %v327
    %v388 = vpack.c.b16 %v330, %v329
    %v389 = vpack.c.b16 %v332, %v331
    %v390 = vpack.c.b16 %v334, %v333
    %v391 = vpack.c.b16 %v336, %v335
    %v392 = vpack.c.b16 %v338, %v337
    %v393 = vpack.c.b16 %v340, %v339
    %v394 = vpack.c.b16 %v342, %v341
    %v395 = vpack.c.b16 %v344, %v343
    %v396 = vpack.c.b16 %v346, %v345
    %v397 = vpack.c.b16 %v348, %v347
    %v398 = vpack.c.b16 %v350, %v349
    %v399 = vpack.c.b16 %v352, %v351
    %v400 = vpack.c.b16 %v354, %v353
    %v401 = vpack.c.b16 %v356, %v355
    %v402 = vpack.c.b16 %v358, %v357
    %v403 = vpack.c.b16 %v360, %v359
    %v404 = vpack.c.b16 %v362, %v361
    %v405 = vpack.c.b16 %v364, %v363
    %v406 = vpack.c.b16 %v366, %v365
    %v407 = vpack.c.b16 %v368, %v367
    %v408 = vpack.c.b16 %v370, %v369
    %v409 = vpack.c.b16 %v372, %v371
    %v410 = vpack.c.b16 %v374, %v373
    %v411 = vpack.c.b16 %v376, %v375
    %v412 = vpack.c.b16 %v378, %v377
    %v413 = vpack.c.b16 %v380, %v379
    %v414 = vpack.c.b16 %v382, %v381
    %447 = vmatpush.bf16.msra.mxu0 %v390
    %448 = vmatpush.bf16.msra.mxu0 %v389
    %449 = vmatpush.bf16.msra.mxu0 %v388
    %450 = vmatpush.bf16.msra.mxu0 %v387
    %451 = vmatpush.bf16.msra.mxu0 %v386
    %452 = vmatpush.bf16.msra.mxu0 %v385
    %453 = vmatpush.bf16.msra.mxu0 %v384
    %454 = vmatpush.bf16.msra.mxu0 %v383
    %455 = vmatmul.bf16.gmra.mxu0 %v183
    %v456 = vpop.f32.mrf.mxu0
    %v457 = vadd.f32 %v253, %v456
    %v458 = vpop.f32.mrf.mxu0
    %459 = vdwg.mxu0
    %460 = vmatpush.bf16.msra.mxu0 %v398
    %461 = vmatpush.bf16.msra.mxu0 %v397
    %462 = vmatpush.bf16.msra.mxu0 %v396
    %463 = vmatpush.bf16.msra.mxu0 %v395
    %464 = vmatpush.bf16.msra.mxu0 %v394
    %465 = vmatpush.bf16.msra.mxu0 %v393
    %466 = vmatpush.bf16.msra.mxu0 %v392
    %467 = vmatpush.bf16.msra.mxu0 %v391
    %468 = vmatmul.bf16.gmra.mxu0 %v184
    %v469 = vpop.f32.mrf.mxu0
    %v470 = vadd.f32 %v457, %v469
    %v471 = vpop.f32.mrf.mxu0
    %472 = vdwg.mxu0
    %473 = vmatpush.bf16.msra.mxu0 %v406
    %474 = vmatpush.bf16.msra.mxu0 %v405
    %475 = vmatpush.bf16.msra.mxu0 %v404
    %476 = vmatpush.bf16.msra.mxu0 %v403
    %477 = vmatpush.bf16.msra.mxu0 %v402
    %478 = vmatpush.bf16.msra.mxu0 %v401
    %479 = vmatpush.bf16.msra.mxu0 %v400
    %480 = vmatpush.bf16.msra.mxu0 %v399
    %481 = vmatmul.bf16.gmra.mxu0 %v185
    %v482 = vpop.f32.mrf.mxu0
    %v483 = vadd.f32 %v470, %v482
    %v484 = vpop.f32.mrf.mxu0
    %485 = vdwg.mxu0
    %486 = vmatpush.bf16.msra.mxu0 %v414
    %487 = vmatpush.bf16.msra.mxu0 %v413
    %488 = vmatpush.bf16.msra.mxu0 %v412
    %489 = vmatpush.bf16.msra.mxu0 %v411
    %490 = vmatpush.bf16.msra.mxu0 %v410
    %491 = vmatpush.bf16.msra.mxu0 %v409
    %492 = vmatpush.bf16.msra.mxu0 %v408
    %493 = vmatpush.bf16.msra.mxu0 %v407
    %494 = vmatmul.bf16.gmra.mxu0 %v186
    %v495 = vpop.f32.mrf.mxu0
    %v496 = vadd.f32 %v483, %v495
    %v497 = vpop.f32.mrf.mxu0
    %498 = vdwg.mxu0
    %v499 = vtanh.pop %v496
    %v501 = vrot.slane %v499, 1
    %v502 = vrot.slane %v499, 2
    %v503 = vrot.slane %v499, 3
    %v504 = vrot.slane %v499, 4
    %v505 = vrot.slane %v499, 5
    %v506 = vrot.slane %v499, 6
    %v507 = vrot.slane %v499, 7
    %v515 = vld [vmem:[%s5] sm:$0x1]
    %v516 = vmul.f32 %v499, %v515
    %v517 = vmul.f32 %v501, %v515
    %v518 = vmul.f32 %v502, %v515
    %v519 = vmul.f32 %v503, %v515
    %v520 = vmul.f32 %v504, %v515
    %v521 = vmul.f32 %v505, %v515
    %v522 = vmul.f32 %v506, %v515
    %v523 = vmul.f32 %v507, %v515
    %vm524 = vcmask 1040384
    %v525 = vsel %vm524, %v516, 0.0
    %526 = vadd.xlane.f32.xlu0 %v525
    %v527 = vpop.xlane.xlu0 %526
    %v528 = vsel %vm524, %v517, 0.0
    %529 = vadd.xlane.f32.xlu0 %v528
    %v530 = vpop.xlane.xlu0 %529
    %v531 = vsel %vm524, %v518, 0.0
    %532 = vadd.xlane.f32.xlu0 %v531
    %v533 = vpop.xlane.xlu0 %532
    %v534 = vsel %vm524, %v519, 0.0
    %535 = vadd.xlane.f32.xlu0 %v534
    %v536 = vpop.xlane.xlu0 %535
    %v537 = vsel %vm524, %v520, 0.0
    %538 = vadd.xlane.f32.xlu0 %v537
    %v539 = vpop.xlane.xlu0 %538
    %v540 = vsel %vm524, %v521, 0.0
    %541 = vadd.xlane.f32.xlu0 %v540
    %v542 = vpop.xlane.xlu0 %541
    %v543 = vsel %vm524, %v522, 0.0
    %544 = vadd.xlane.f32.xlu0 %v543
    %v545 = vpop.xlane.xlu0 %544
    %v546 = vsel %vm524, %v523, 0.0
    %547 = vadd.xlane.f32.xlu0 %v546
    %v548 = vpop.xlane.xlu0 %547
    %v549 = vld [vmem:[#allocation2] sm:$0x1]
    %v551 = vperm.slane %v549, 0
    %v552 = vlaneseq
    %v553 = vshrl.u32 %v552, 7
    %555 = vset.pattern.permute.xlu0 %v553
    %556 = vperm.xlu0 %555, %v551
    %v557 = vpop.permute.xlu0 %556
    %v559 = vadd.f32 %v527, %v557
    %v560 = vadd.f32 %v530, %v557
    %v561 = vadd.f32 %v533, %v557
    %v562 = vadd.f32 %v536, %v557
    %v563 = vadd.f32 %v539, %v557
    %v564 = vadd.f32 %v542, %v557
    %v565 = vadd.f32 %v545, %v557
    %v566 = vadd.f32 %v548, %v557
    %v575 = vrot.slane %v560, 7
    %vm576 = vcmask 1041409
    %v577 = vsel %vm576, %v575, %v559
    %v578 = vrot.slane %v561, 6
    %vm579 = vcmask 1042434
    %v580 = vsel %vm579, %v578, %v577
    %v581 = vrot.slane %v562, 5
    %vm582 = vcmask 1043459
    %v583 = vsel %vm582, %v581, %v580
    %v584 = vrot.slane %v563, 4
    %vm585 = vcmask 1044484
    %v586 = vsel %vm585, %v584, %v583
    %v587 = vrot.slane %v564, 3
    %vm588 = vcmask 1045509
    %v589 = vsel %vm588, %v587, %v586
    %v590 = vrot.slane %v565, 2
    %vm591 = vcmask 1046534
    %v592 = vsel %vm591, %v590, %v589
    %v593 = vrot.slane %v566, 1
    %vm594 = vcmask 1047559
    %v595 = vsel %vm594, %v593, %v592
    %vm597 = vcmask 7168
    %598 = vst.msk [vmem:[%s7] sm:$0xff] %vm597, %v595
    // Predicated region
    $region46: #{tpu_custom_call.1} parent=1 // pred_check
      _
    $region47: #{tpu_custom_call.1} parent=1 // pred_check_branch
      %600 = sbr.rel (0) target = $region49
    $region48: #{tpu_custom_call.1} parent=1 // pred_region
      _
    $region49: #{tpu_custom_call.1} parent=1 // pred_fallthru
      _
    // Predicated region
    $region50: #{tpu_custom_call.1} parent=1 // pred_check
      _
    $region51: #{tpu_custom_call.1} parent=1 // pred_check_branch
      %602 = sbr.rel (0) target = $region53
    $region52: #{tpu_custom_call.1} parent=1 // pred_region
      _
    $region53: #{tpu_custom_call.1} parent=1 // pred_fallthru
      _
    %603 = vsyncpa [#allocation4], 1
    %604 = vsyncpa [#allocation6], 1
    %605 = vsyncpa [#allocation9], 1

</llo_original>
